<compile_context>
chip_gen: v5e
topology: v5e:2x2
jax: 0.10.0
libtpu: 0.0.40
codegen_flags: <defaults>
</compile_context>

<pallas_src>
import functools

import jax
import jax.numpy as jnp
from jax.experimental import pallas as pl
from jax.experimental.pallas import tpu as pltpu

EPS = 1e-6


def _round_up(n, m):
    return ((n + m - 1) // m) * m


def _vmem_capacity_bytes():
    """Physical VMEM of the current TPU generation (conservative fallback)."""
    try:
        info = pltpu.get_tpu_info()
        cap = getattr(info, "vmem_capacity_bytes", None)
        if cap:
            return int(cap)
    except Exception:
        pass
    return 64 << 20  # v7x physical; safe lower bound for all generations


def _vmem_estimate(tr, hp, x_bytes):
    """Double-buffered footprint of one grid step + f32 temporaries margin."""
    io = 2 * tr * hp * x_bytes * 2                 # x tile + out tile, 2 bufs each
    params = 2 * (hp * hp * 2 + 3 * hp * 4)        # bf16 W + a2/b2/bias, 2 bufs each
    tmp = 4 * tr * hp * 4                          # in-kernel f32 temporaries
    return io + params + tmp


def sublayer_output_kernel(x_ref, a2_ref, b2_ref, wt_ref, b_ref, o_ref, *, h_real):
    x = x_ref[...].astype(jnp.float32)                       # (TR, Hp)

    # LayerNorm with torch.std semantics: unbiased (n-1) variance, eps on std.
    # Padded columns of x are zero, so full-width sum(x) and sum(x*x) equal the
    # real-H sums -> no per-step iota/where mask needed.
    inv_n = 1.0 / float(h_real)
    s1 = jnp.sum(x, axis=-1, keepdims=True)
    s2 = jnp.sum(x * x, axis=-1, keepdims=True)
    mean = s1 * inv_n
    var = (s2 - s1 * mean) * (1.0 / float(max(h_real - 1, 1)))
    var = jnp.maximum(var, 0.0)                               # fp guard
    std = jnp.sqrt(var)
    inv = pl.reciprocal(std + EPS)                            # EUP slot, f32 parity
    # a2/b2 are zero in padded columns -> normed is exactly zero there.
    normed = a2_ref[...] * ((x - mean) * inv) + b2_ref[...]

    # sublayer = Linear(H, H): normed @ W^T.  wt_ref holds W^T (pre-transposed
    # once in the wrapper) so the MXU sees a standard (K, N) RHS.
    # bf16 operands, f32 accumulation.
    y = jax.lax.dot_general(
        normed.astype(jnp.bfloat16),
        wt_ref[...],                                          # bf16 (Hp, Hp)
        dimension_numbers=(((1,), (0,)), ((), ())),
        preferred_element_type=jnp.float32,
    )
    y = y + b_ref[...]

    # dropout (eval mode) = identity; residual add in f32.
    o_ref[...] = (x + y).astype(o_ref.dtype)


def prepare_sublayer_params(a2, b2, w, b, hp):
    """One-time (static-parameter) pad + cast + transpose. Cache across calls."""
    h = a2.shape[0]
    pad = hp - h
    a2_p = jnp.pad(a2.astype(jnp.float32), (0, pad)).reshape(1, hp)
    b2_p = jnp.pad(b2.astype(jnp.float32), (0, pad)).reshape(1, hp)
    b_p = jnp.pad(b.astype(jnp.float32), (0, pad)).reshape(1, hp)
    # W^T, padded, bf16: halves DMA/VMEM footprint; MXU is bf16-native.
    wt_p = jnp.pad(w, ((0, pad), (0, pad))).T.astype(jnp.bfloat16)
    return a2_p, b2_p, wt_p, b_p


def sublayer_output(x, a2, b2, w, b, *, block_rows=512):
    """x: (B, S, H); a2, b2, b: (H,); w: (H, H)  ->  (B, S, H)"""
    B, S, H = x.shape
    R = B * S

    # Lane-dense hidden axis (multiple of 128).
    Hp = _round_up(max(H, 128), 128)

    # Row tile: biggest sublane-aligned tile <= block_rows that fits the
    # per-generation VMEM budget (16 MiB headroom, <= 100 MiB).
    x_bytes = jnp.dtype(x.dtype).itemsize
    cap = min(_vmem_capacity_bytes() - (16 << 20), 100 << 20)
    TR = min(block_rows, _round_up(R, 8))
    while TR > 8 and _vmem_estimate(TR, Hp, x_bytes) > cap:
        TR = max(8, _round_up(TR // 2, 8))
    est = _vmem_estimate(TR, Hp, x_bytes)
    vmem_limit = int(min(cap, max(est, 32 << 20)))

    Rp = _round_up(R, TR)

    # Only pad / slice when the shape is actually ragged (avoids an extra HBM
    # read+write pass over the activations in the aligned case).
    x2 = x.reshape(R, H)
    ragged = (Rp != R) or (Hp != H)
    if ragged:
        x2 = jnp.pad(x2, ((0, Rp - R), (0, Hp - H)))

    a2_p, b2_p, wt_p, b_p = prepare_sublayer_params(a2, b2, w, b, Hp)

    kernel = functools.partial(sublayer_output_kernel, h_real=H)

    out = pl.pallas_call(
        kernel,
        out_shape=jax.ShapeDtypeStruct((Rp, Hp), x.dtype),
        grid=(Rp // TR,),
        in_specs=[
            pl.BlockSpec((TR, Hp), lambda i: (i, 0)),   # x: streamed row tiles
            pl.BlockSpec((1, Hp), lambda i: (0, 0)),    # a_2: VMEM-resident
            pl.BlockSpec((1, Hp), lambda i: (0, 0)),    # b_2: VMEM-resident
            pl.BlockSpec((Hp, Hp), lambda i: (0, 0)),   # W^T (bf16): VMEM-resident
            pl.BlockSpec((1, Hp), lambda i: (0, 0)),    # bias: VMEM-resident
        ],
        out_specs=pl.BlockSpec((TR, Hp), lambda i: (i, 0)),
        compiler_params=pltpu.CompilerParams(
            dimension_semantics=("parallel",),          # v7x: shard rows across TCs
            vmem_limit_bytes=vmem_limit,
        ),
    )(x2, a2_p, b2_p, wt_p, b_p)

    if ragged:
        out = out[:R, :H]
    return out.reshape(B, S, H)


if __name__ == "__main__":
    B, S, H = 2, 8, 32
    key = jax.random.PRNGKey(0)
    kx, kw, kb = jax.random.split(key, 3)

    x = jax.random.normal(kx, (B, S, H), dtype=jnp.float32)

    # LayerNorm params: a_2 = ones, b_2 = zeros (as in __init__)
    a2 = jnp.ones((H,), dtype=jnp.float32)
    b2 = jnp.zeros((H,), dtype=jnp.float32)

    # Deterministic synthetic sublayer (Linear(H, H)) parameters
    w = jax.random.normal(kw, (H, H), dtype=jnp.float32) * 0.05
    b = jax.random.normal(kb, (H,), dtype=jnp.float32) * 0.05

    out = sublayer_output(x, a2, b2, w, b)
    out = jax.block_until_ready(out)

    # Reference in plain JAX (same unbiased-std LayerNorm semantics), f32.
    mean = jnp.mean(x, axis=-1, keepdims=True)
    diff = x - mean
    std = jnp.sqrt(jnp.sum(diff * diff, axis=-1, keepdims=True) / (H - 1))
    normed = a2 * diff / (std + EPS) + b2
    ref = x + (normed @ w.T + b)

    # bf16 matmul operands => looser tolerance than pure f32.
    assert jnp.allclose(out, ref, atol=2e-2, rtol=2e-2), float(
        jnp.max(jnp.abs(out - ref))
    )

    print("KERNEL_OK")
</pallas_src>

<mosaic_0001>
module attributes {stable_mosaic.version = 11 : i64} {
  func.func @sublayer_output_kernel(%arg0: i32, %arg1: memref<16x128xf32, #tpu.memory_space<vmem>>, %arg2: memref<1x128xf32, #tpu.memory_space<vmem>>, %arg3: memref<1x128xf32, #tpu.memory_space<vmem>>, %arg4: memref<128x128xbf16, #tpu.memory_space<vmem>>, %arg5: memref<1x128xf32, #tpu.memory_space<vmem>>, %arg6: memref<16x128xf32, #tpu.memory_space<vmem>>) attributes {dimension_semantics = [#tpu.dimension_semantics<parallel>], iteration_bounds = array<i64: 1>, scalar_prefetch = 0 : i64, scratch_operands = 0 : i64, tpu.core_type = #tpu.core_type<tc>, window_params = [{transform_indices = @transform_0, window_bounds = array<i64: 16, 128>}, {pipeline_mode = #tpu.pipeline_mode<synchronous>, transform_indices = @transform_1, window_bounds = array<i64: 1, 128>}, {pipeline_mode = #tpu.pipeline_mode<synchronous>, transform_indices = @transform_2, window_bounds = array<i64: 1, 128>}, {pipeline_mode = #tpu.pipeline_mode<synchronous>, transform_indices = @transform_3, window_bounds = array<i64: 128, 128>}, {pipeline_mode = #tpu.pipeline_mode<synchronous>, transform_indices = @transform_4, window_bounds = array<i64: 1, 128>}, {transform_indices = @transform_5, window_bounds = array<i64: 16, 128>}]} {
    %c0 = arith.constant 0 : index
    %c0_0 = arith.constant 0 : index
    %0 = vector.load %arg1[%c0, %c0_0] : memref<16x128xf32, #tpu.memory_space<vmem>>, vector<16x128xf32>
    %cst = arith.constant dense<0.000000e+00> : vector<16xf32>
    %1 = vector.multi_reduction <add>, %0, %cst [1] : vector<16x128xf32> to vector<16xf32>
    %2 = vector.shape_cast %1 : vector<16xf32> to vector<16x1xf32>
    %3 = arith.mulf %0, %0 : vector<16x128xf32>
    %cst_1 = arith.constant dense<0.000000e+00> : vector<16xf32>
    %4 = vector.multi_reduction <add>, %3, %cst_1 [1] : vector<16x128xf32> to vector<16xf32>
    %5 = vector.shape_cast %4 : vector<16xf32> to vector<16x1xf32>
    %cst_2 = arith.constant 3.125000e-02 : f32
    %6 = vector.broadcast %cst_2 : f32 to vector<16x1xf32>
    %7 = arith.mulf %2, %6 : vector<16x1xf32>
    %8 = arith.mulf %2, %7 : vector<16x1xf32>
    %9 = arith.subf %5, %8 : vector<16x1xf32>
    %cst_3 = arith.constant 0.0322580636 : f32
    %10 = vector.broadcast %cst_3 : f32 to vector<16x1xf32>
    %11 = arith.mulf %9, %10 : vector<16x1xf32>
    %cst_4 = arith.constant 0.000000e+00 : f32
    %12 = vector.broadcast %cst_4 : f32 to vector<16x1xf32>
    %13 = arith.maximumf %11, %12 : vector<16x1xf32>
    %14 = math.sqrt %13 : vector<16x1xf32>
    %cst_5 = arith.constant 9.99999997E-7 : f32
    %15 = vector.broadcast %cst_5 : f32 to vector<16x1xf32>
    %16 = arith.addf %14, %15 : vector<16x1xf32>
    %17 = tpu.reciprocal %16 : vector<16x1xf32> -> vector<16x1xf32>
    %c0_6 = arith.constant 0 : index
    %c0_7 = arith.constant 0 : index
    %18 = vector.load %arg2[%c0_6, %c0_7] : memref<1x128xf32, #tpu.memory_space<vmem>>, vector<1x128xf32>
    %19 = vector.broadcast %7 : vector<16x1xf32> to vector<16x128xf32>
    %20 = arith.subf %0, %19 : vector<16x128xf32>
    %21 = vector.broadcast %17 : vector<16x1xf32> to vector<16x128xf32>
    %22 = arith.mulf %20, %21 : vector<16x128xf32>
    %23 = vector.broadcast %18 : vector<1x128xf32> to vector<16x128xf32>
    %24 = arith.mulf %23, %22 : vector<16x128xf32>
    %c0_8 = arith.constant 0 : index
    %c0_9 = arith.constant 0 : index
    %25 = vector.load %arg3[%c0_8, %c0_9] : memref<1x128xf32, #tpu.memory_space<vmem>>, vector<1x128xf32>
    %26 = vector.broadcast %25 : vector<1x128xf32> to vector<16x128xf32>
    %27 = arith.addf %24, %26 : vector<16x128xf32>
    %28 = arith.truncf %27 : vector<16x128xf32> to vector<16x128xbf16>
    %c0_10 = arith.constant 0 : index
    %c0_11 = arith.constant 0 : index
    %29 = vector.load %arg4[%c0_10, %c0_11] : memref<128x128xbf16, #tpu.memory_space<vmem>>, vector<128x128xbf16>
    %cst_12 = arith.constant dense<0.000000e+00> : vector<16x128xf32>
    %30 = tpu.matmul %28, %29, %cst_12 {dimension_numbers = #tpu.dot_dimension_numbers<[1], [0], [0], [1], [0, 0, 1, 1], [], []>} : vector<16x128xbf16>, vector<128x128xbf16>, vector<16x128xf32> -> vector<16x128xf32>
    %c0_13 = arith.constant 0 : index
    %c0_14 = arith.constant 0 : index
    %31 = vector.load %arg5[%c0_13, %c0_14] : memref<1x128xf32, #tpu.memory_space<vmem>>, vector<1x128xf32>
    %32 = vector.broadcast %31 : vector<1x128xf32> to vector<16x128xf32>
    %33 = arith.addf %30, %32 : vector<16x128xf32>
    %34 = arith.addf %0, %33 : vector<16x128xf32>
    %c0_15 = arith.constant 0 : index
    %c0_16 = arith.constant 0 : index
    %35 = vector.load %arg6[%c0_15, %c0_16] : memref<16x128xf32, #tpu.memory_space<vmem>>, vector<16x128xf32>
    tpu.vector_store %arg6[%c0_15, %c0_16], %34 {strides = array<i32>} : memref<16x128xf32, #tpu.memory_space<vmem>>, vector<16x128xf32>,
    return
  }
  func.func @transform_0(%arg0: i32) -> (i32, i32) {
    %c0_i32 = arith.constant 0 : i32
    %c0_i32_0 = arith.constant 0 : i32
    return %arg0, %c0_i32 : i32, i32
  }
  func.func @transform_1(%arg0: i32) -> (i32, i32) {
    %c0_i32 = arith.constant 0 : i32
    %c0_i32_0 = arith.constant 0 : i32
    %c0_i32_1 = arith.constant 0 : i32
    return %c0_i32, %c0_i32_0 : i32, i32
  }
  func.func @transform_2(%arg0: i32) -> (i32, i32) {
    %c0_i32 = arith.constant 0 : i32
    %c0_i32_0 = arith.constant 0 : i32
    %c0_i32_1 = arith.constant 0 : i32
    return %c0_i32, %c0_i32_0 : i32, i32
  }
  func.func @transform_3(%arg0: i32) -> (i32, i32) {
    %c0_i32 = arith.constant 0 : i32
    %c0_i32_0 = arith.constant 0 : i32
    %c0_i32_1 = arith.constant 0 : i32
    return %c0_i32, %c0_i32_0 : i32, i32
  }
  func.func @transform_4(%arg0: i32) -> (i32, i32) {
    %c0_i32 = arith.constant 0 : i32
    %c0_i32_0 = arith.constant 0 : i32
    %c0_i32_1 = arith.constant 0 : i32
    return %c0_i32, %c0_i32_0 : i32, i32
  }
  func.func @transform_5(%arg0: i32) -> (i32, i32) {
    %c0_i32 = arith.constant 0 : i32
    %c0_i32_0 = arith.constant 0 : i32
    return %arg0, %c0_i32 : i32, i32
  }
}

</mosaic_0001>

<llo_original>
// kernel: tpu_custom_call.1
$region0: #{tpu_custom_call.1}
  #allocation0 [shape = 'u32[]', space=smem, size = 0x4, offset = 0x4, fixed_abs, tag = 'smem constant byte address 0x4 - core index']
  #allocation1 [shape = 'u32[72,128]{1,0:T(1,128)}', space=vmem, size = 0x9000, scoped, tag = 'internal scratch']
  %s0 = inlined_call_operand.hbm [shape: f32[16,128], index: 0, kind: input, shape index: {}]
  %s1 = inlined_call_operand.hbm [shape: f32[1,128], index: 1, kind: input, shape index: {}]
  %s2 = inlined_call_operand.vmem [shape: f32[1,128], index: 2, kind: input, shape index: {}]
  %s3 = inlined_call_operand.hbm [shape: bf16[128,128], index: 3, kind: input, shape index: {}]
  %s4 = inlined_call_operand.vmem [shape: f32[1,128], index: 4, kind: input, shape index: {}]
  %s5 = inlined_call_operand.hbm [shape: f32[16,128], index: 5, kind: output, shape index: {}]
  %s6 = sld [smem:[#allocation0]]
  $region42: #{tpu_custom_call.1} parent=0
    _
  %s8 = ssub.s32 1, %s6
  %s9 = scalar_select 0, %s8, %s6
  $region1: #{tpu_custom_call.1} parent=0
    #allocation2 [shape = 'u8[8192]{0}', space=vmem, size = 0x2000, scoped, tag = 'input window, operand 0, single buffered']
    #allocation3 [shape = 's32[1]{0}', space=sflag, size = 0x4, scoped, tag = 'scoped memory for tpu_custom_call.1']
    #allocation4 [shape = 's32[1]{0}', space=sflag, size = 0x4, scoped, tag = 'scoped memory for tpu_custom_call.1']
    #allocation5 [shape = 'u8[512]{0}', space=vmem, size = 0x400, scoped, tag = 'input window, operand 1, single buffered']
    #allocation6 [shape = 's32[1]{0}', space=sflag, size = 0x4, scoped, tag = 'scoped memory for tpu_custom_call.1']
    #allocation7 [shape = 'u8[32768]{0}', space=vmem, size = 0x8000, scoped, tag = 'input window, operand 3, single buffered']
    #allocation8 [shape = 'u8[8192]{0}', space=vmem, size = 0x2000, scoped, tag = 'output window, operand 0, single buffered']
    %10 = vsyncpa [#allocation3], 0
    %11 = vsyncpa [#allocation6], 0
    %12 = vsyncpa [#allocation4], 0
    // Predicated region
    $region2: #{tpu_custom_call.1} parent=1 // pred_check
      _
    $region3: #{tpu_custom_call.1} parent=1 // pred_check_branch
      %14 = sbr.rel (0) target = $region5
    $region4: #{tpu_custom_call.1} parent=1 // pred_region
      %16 = vsyncadd [#allocation3], 0
      %s17 = sshll.u32 %s0, 4
      %s18 = int_to_ptr.hbm [resolvable:$true] %s17
      %s19 = sshll.u32 [#allocation2], 4
      %s20 = int_to_ptr.vmem [resolvable:$true] %s19
      %25 = dma.hbm_to_vmem [thread:$0]  %s18, 256, %s20, [#allocation3], 128, 128, 8
    $region5: #{tpu_custom_call.1} parent=1 // pred_fallthru
      _
    // Predicated region
    $region6: #{tpu_custom_call.1} parent=1 // pred_check
      _
    $region7: #{tpu_custom_call.1} parent=1 // pred_check_branch
      %27 = sbr.rel (0) target = $region9
    $region8: #{tpu_custom_call.1} parent=1 // pred_region
      %29 = vsyncadd [#allocation6], 0
      %s31 = sshll.u32 %s1, 4
      %s32 = int_to_ptr.hbm [resolvable:$true] %s31
      %s33 = sshll.u32 [#allocation5], 4
      %s34 = int_to_ptr.vmem [resolvable:$true] %s33
      %36 = dma.hbm_to_vmem [thread:$0]  %s32, 16, %s34, [#allocation6]
    $region9: #{tpu_custom_call.1} parent=1 // pred_fallthru
      _
    // Predicated region
    $region10: #{tpu_custom_call.1} parent=1 // pred_check
      _
    $region11: #{tpu_custom_call.1} parent=1 // pred_check_branch
      %38 = sbr.rel (0) target = $region13
    $region12: #{tpu_custom_call.1} parent=1 // pred_region
      _
    $region13: #{tpu_custom_call.1} parent=1 // pred_fallthru
      _
    // Predicated region
    $region14: #{tpu_custom_call.1} parent=1 // pred_check
      _
    $region15: #{tpu_custom_call.1} parent=1 // pred_check_branch
      %40 = sbr.rel (0) target = $region17
    $region16: #{tpu_custom_call.1} parent=1 // pred_region
      %42 = vsyncadd [#allocation6], 0
      %s43 = sshll.u32 %s3, 4
      %s44 = int_to_ptr.hbm [resolvable:$true] %s43
      %s45 = sshll.u32 [#allocation7], 4
      %s46 = int_to_ptr.vmem [resolvable:$true] %s45
      %51 = dma.hbm_to_vmem [thread:$0]  %s44, 1024, %s46, [#allocation6], 64, 64, 4
    $region17: #{tpu_custom_call.1} parent=1 // pred_fallthru
      _
    // Predicated region
    $region18: #{tpu_custom_call.1} parent=1 // pred_check
      _
    $region19: #{tpu_custom_call.1} parent=1 // pred_check_branch
      %53 = sbr.rel (0) target = $region21
    $region20: #{tpu_custom_call.1} parent=1 // pred_region
      _
    $region21: #{tpu_custom_call.1} parent=1 // pred_fallthru
      _
    // Predicated region
    $region22: #{tpu_custom_call.1} parent=1 // pred_check
      _
    $region23: #{tpu_custom_call.1} parent=1 // pred_check_branch
      %55 = sbr.rel (0) target = $region25
    $region24: #{tpu_custom_call.1} parent=1 // pred_region
      %57 = dma.done [#allocation3], 256
    $region25: #{tpu_custom_call.1} parent=1 // pred_fallthru
      _
    // Predicated region
    $region26: #{tpu_custom_call.1} parent=1 // pred_check
      _
    $region27: #{tpu_custom_call.1} parent=1 // pred_check_branch
      %59 = sbr.rel (0) target = $region29
    $region28: #{tpu_custom_call.1} parent=1 // pred_region
      %61 = dma.done [#allocation6], 16
    $region29: #{tpu_custom_call.1} parent=1 // pred_fallthru
      _
    // Predicated region
    $region30: #{tpu_custom_call.1} parent=1 // pred_check
      _
    $region31: #{tpu_custom_call.1} parent=1 // pred_check_branch
      %63 = sbr.rel (0) target = $region33
    $region32: #{tpu_custom_call.1} parent=1 // pred_region
      %65 = dma.done [#allocation6], 1024
    $region33: #{tpu_custom_call.1} parent=1 // pred_fallthru
      _
    %v66 = vld [vmem:[#allocation2] sm:$0xff]
    %v67 = vld [vmem:[#allocation2 + $0x8] sm:$0xff]
    %68 = vadd.xlane.f32.xlu0 %v66
    %v69 = vpop.xlane.xlu0 %68
    %70 = vadd.xlane.f32.xlu0 %v67
    %v71 = vpop.xlane.xlu0 %70
    %v72 = vmul.f32 %v66, %v66
    %v73 = vmul.f32 %v67, %v67
    %74 = vadd.xlane.f32.xlu0 %v72
    %v75 = vpop.xlane.xlu0 %74
    %76 = vadd.xlane.f32.xlu0 %v73
    %v77 = vpop.xlane.xlu0 %76
    %v78 = vmul.f32 %v69, 0.03125
    %v79 = vmul.f32 %v71, 0.03125
    %v80 = vmul.f32 %v69, %v78
    %v81 = vmul.f32 %v71, %v79
    %v82 = vsub.f32 %v75, %v80
    %v83 = vsub.f32 %v77, %v81
    %v84 = vmul.f32 %v82, 0.032258064
    %v85 = vmul.f32 %v83, 0.032258064
    %v86 = vmax.f32 %v84, 0.0
    %v87 = vmax.f32 %v85, 0.0
    %v88 = vrsqrt.pop %v86
    %v89 = vmul.f32 %v88, %v86
    %v90 = vmul.f32 %v89, %v88
    %v91 = vmul.f32 0.5, %v90
    %v92 = vsub.f32 1.5, %v91
    %v93 = vmul.f32 %v88, %v92
    %v94 = vmul.f32 %v86, %v93
    %vm95 = vcmp.eq.f32.partialorder %v86, inf
    %v96 = vsel %vm95, %v86, %v94
    %vm97 = vcmp.eq.f32.partialorder %v86, 0.0
    %v98 = vand.u32 %v86, 2147483648
    %v99 = vsel %vm97, %v98, %v96
    %v100 = vrsqrt.pop %v87
    %v101 = vmul.f32 %v100, %v87
    %v102 = vmul.f32 %v101, %v100
    %v103 = vmul.f32 0.5, %v102
    %v104 = vsub.f32 1.5, %v103
    %v105 = vmul.f32 %v100, %v104
    %v106 = vmul.f32 %v87, %v105
    %vm107 = vcmp.eq.f32.partialorder %v87, inf
    %v108 = vsel %vm107, %v87, %v106
    %vm109 = vcmp.eq.f32.partialorder %v87, 0.0
    %v110 = vand.u32 %v87, 2147483648
    %v111 = vsel %vm109, %v110, %v108
    %v112 = vadd.f32 %v99, 1e-06
    %v113 = vadd.f32 %v111, 1e-06
    %v114 = vrcp.pop %v112
    %v115 = vmul.f32 %v112, %v114
    %v116 = vsub.f32 1.0, %v115
    %v117 = vmul.f32 %v114, %v116
    %v118 = vadd.f32 %v114, %v117
    %vm119 = vweird.f32 %v112
    %vm120 = vweird.f32 %v114
    %vm121 = vmor %vm119, %vm120
    %v122 = vsel %vm121, %v114, %v118
    %v123 = vand.u32 2147483647, %v112
    %vm124 = vcmp.eq.f32.partialorder %v123, 8.507059e+37
    %v125 = vand.u32 %v112, 2147483648
    %v126 = vor.u32 1.1754944e-38, %v125
    %v127 = vsel %vm124, %v126, %v122
    %v128 = vrcp.pop %v113
    %v129 = vmul.f32 %v113, %v128
    %v130 = vsub.f32 1.0, %v129
    %v131 = vmul.f32 %v128, %v130
    %v132 = vadd.f32 %v128, %v131
    %vm133 = vweird.f32 %v113
    %vm134 = vweird.f32 %v128
    %vm135 = vmor %vm133, %vm134
    %v136 = vsel %vm135, %v128, %v132
    %v137 = vand.u32 2147483647, %v113
    %vm138 = vcmp.eq.f32.partialorder %v137, 8.507059e+37
    %v139 = vand.u32 %v113, 2147483648
    %v140 = vor.u32 1.1754944e-38, %v139
    %v141 = vsel %vm138, %v140, %v136
    %v142 = vld [vmem:[#allocation5] sm:$0x1]
    %v143 = vsub.f32 %v66, %v78
    %v144 = vsub.f32 %v67, %v79
    %v145 = vmul.f32 %v143, %v127
    %v146 = vmul.f32 %v144, %v141
    %v148 = vperm.slane %v142, 0
    %v150 = vmul.f32 %v148, %v145
    %v151 = vmul.f32 %v148, %v146
    %v152 = vld [vmem:[%s2] sm:$0x1]
    %v154 = vperm.slane %v152, 0
    %v156 = vadd.f32 %v150, %v154
    %v157 = vadd.f32 %v151, %v154
    %v158 = vpack.c.bf16 %v157, %v156
    %v159 = vld [vmem:[#allocation7] sm:$0xf]
    %v160 = vld [vmem:[#allocation7 + $0x4] sm:$0xf]
    %v161 = vld [vmem:[#allocation7 + $0x8] sm:$0xf]
    %v162 = vld [vmem:[#allocation7 + $0xc] sm:$0xf]
    %v163 = vld [vmem:[#allocation7 + $0x10] sm:$0xf]
    %v164 = vld [vmem:[#allocation7 + $0x14] sm:$0xf]
    %v165 = vld [vmem:[#allocation7 + $0x18] sm:$0xf]
    %v166 = vld [vmem:[#allocation7 + $0x1c] sm:$0xf]
    %v167 = vld [vmem:[#allocation7 + $0x20] sm:$0xf]
    %v168 = vld [vmem:[#allocation7 + $0x24] sm:$0xf]
    %v169 = vld [vmem:[#allocation7 + $0x28] sm:$0xf]
    %v170 = vld [vmem:[#allocation7 + $0x2c] sm:$0xf]
    %v171 = vld [vmem:[#allocation7 + $0x30] sm:$0xf]
    %v172 = vld [vmem:[#allocation7 + $0x34] sm:$0xf]
    %v173 = vld [vmem:[#allocation7 + $0x38] sm:$0xf]
    %v174 = vld [vmem:[#allocation7 + $0x3c] sm:$0xf]
    %v175 = vld [vmem:[%s4] sm:$0x1]
    %v177 = vperm.slane %v175, 0
    %v195 = vunpack.c.l.b16 %v159
    %v196 = vunpack.c.l.b16 %v160
    %v197 = vunpack.c.l.b16 %v161
    %v198 = vunpack.c.l.b16 %v162
    %v199 = vunpack.c.l.b16 %v163
    %v200 = vunpack.c.l.b16 %v164
    %v201 = vunpack.c.l.b16 %v165
    %v202 = vunpack.c.l.b16 %v166
    %v203 = vunpack.c.l.b16 %v167
    %v204 = vunpack.c.l.b16 %v168
    %v205 = vunpack.c.l.b16 %v169
    %v206 = vunpack.c.l.b16 %v170
    %v207 = vunpack.c.l.b16 %v171
    %v208 = vunpack.c.l.b16 %v172
    %v209 = vunpack.c.l.b16 %v173
    %v210 = vunpack.c.l.b16 %v174
    %v211 = vpack.c.b16 %v196, %v195
    %v212 = vpack.c.b16 %v198, %v197
    %v213 = vpack.c.b16 %v200, %v199
    %v214 = vpack.c.b16 %v202, %v201
    %v215 = vpack.c.b16 %v204, %v203
    %v216 = vpack.c.b16 %v206, %v205
    %v217 = vpack.c.b16 %v208, %v207
    %v218 = vpack.c.b16 %v210, %v209
    %227 = vmatpush.bf16.msra.mxu0 %v218
    %228 = vmatpush.bf16.msra.mxu0 %v217
    %229 = vmatpush.bf16.msra.mxu0 %v216
    %230 = vmatpush.bf16.msra.mxu0 %v215
    %231 = vmatpush.bf16.msra.mxu0 %v214
    %232 = vmatpush.bf16.msra.mxu0 %v213
    %233 = vmatpush.bf16.msra.mxu0 %v212
    %234 = vmatpush.bf16.msra.mxu0 %v211
    %235 = vmatmul.bf16.gmra.mxu0 %v158
    %v236 = vpop.f32.mrf.mxu0
    %v237 = vadd.f32 %v177, %v236
    %v238 = vpop.f32.mrf.mxu0
    %v239 = vadd.f32 %v177, %v238
    %240 = vdwg.mxu0
    %v241 = vadd.f32 %v66, %v237
    %v242 = vadd.f32 %v67, %v239
    %243 = vst [vmem:[#allocation8] sm:$0xff] %v241
    %244 = vst [vmem:[#allocation8 + $0x8] sm:$0xff] %v242
    // Predicated region
    $region34: #{tpu_custom_call.1} parent=1 // pred_check
      _
    $region35: #{tpu_custom_call.1} parent=1 // pred_check_branch
      %246 = sbr.rel (0) target = $region37
    $region36: #{tpu_custom_call.1} parent=1 // pred_region
      %248 = vsyncadd [#allocation4], 0
      %s249 = sshll.u32 [#allocation8], 4
      %s250 = int_to_ptr.vmem [resolvable:$true] %s249
      %s251 = sshll.u32 %s5, 4
      %s252 = int_to_ptr.hbm [resolvable:$true] %s251
      %257 = dma.vmem_to_hbm [thread:$0]  %s250, 256, %s252, [#allocation4], 128, 128, 8
    $region37: #{tpu_custom_call.1} parent=1 // pred_fallthru
      _
    // Predicated region
    $region38: #{tpu_custom_call.1} parent=1 // pred_check
      _
    $region39: #{tpu_custom_call.1} parent=1 // pred_check_branch
      %259 = sbr.rel (0) target = $region41
    $region40: #{tpu_custom_call.1} parent=1 // pred_region
      %261 = dma.done [#allocation4], 256
    $region41: #{tpu_custom_call.1} parent=1 // pred_fallthru
      _
    %262 = vsyncpa [#allocation3], 1
    %263 = vsyncpa [#allocation6], 1
    %264 = vsyncpa [#allocation4], 1

</llo_original>
